<compile_context>
chip_gen: v7x
topology: tpu7x:2x2x1
jax: 0.10.0
libtpu: 0.0.40
codegen_flags: <defaults>
</compile_context>

<pallas_src>
import math

import jax
import jax.numpy as jnp
from jax.experimental import pallas as pl
from jax.experimental.pallas import tpu as pltpu

# ---------------------------------------------------------------------------
# Configuration (small synthetic sizes; real RAFT resizes to 520x960).
# ---------------------------------------------------------------------------
BACKBONE_H = 24          # stand-in for 520
BACKBONE_W = 32          # stand-in for 960
HW = BACKBONE_H * BACKBONE_W       # 768 -> multiple of 128 (lane-dense)
C_FEAT = 32              # encoder feature channels
K_PATCH = 3 * 3 * 3      # 3x3 conv over RGB -> 27 patch features
K_PAD = 32               # K padded: 27 patch rows + 1 ones row (bias) + 4 zero rows
Q_TILE = HW // 2         # query tile (2 tiles/clip -> >=2 parallel steps even at N=1)
K_TILE = HW // 2         # key tile of the online softmax (k grid axis, "arbitrary")


# ---------------------------------------------------------------------------
# Glue: bilinear resize, NCHW, align_corners=False, antialias=False
# (matches torchvision.transforms.functional.resize(antialias=False)).
# ---------------------------------------------------------------------------
def _resize_bilinear_nchw(x, out_h, out_w):
    n, c, h, w = x.shape
    scale_h = h / out_h
    scale_w = w / out_w
    ys = jnp.maximum((jnp.arange(out_h, dtype=jnp.float32) + 0.5) * scale_h - 0.5, 0.0)
    xs = jnp.maximum((jnp.arange(out_w, dtype=jnp.float32) + 0.5) * scale_w - 0.5, 0.0)
    y0 = jnp.floor(ys).astype(jnp.int32)
    x0 = jnp.floor(xs).astype(jnp.int32)
    y1 = jnp.minimum(y0 + 1, h - 1)
    x1 = jnp.minimum(x0 + 1, w - 1)
    wy = (ys - y0.astype(jnp.float32))[None, None, :, None]
    wx = (xs - x0.astype(jnp.float32))[None, None, None, :]

    def gather(yi, xi):
        return x[:, :, yi, :][:, :, :, xi]

    top = gather(y0, x0) * (1.0 - wx) + gather(y0, x1) * wx
    bot = gather(y1, x0) * (1.0 - wx) + gather(y1, x1) * wx
    return top * (1.0 - wy) + bot * wy


# ---------------------------------------------------------------------------
# Pallas kernel 1: feature encoder (3x3 conv as matmul + ReLU).
# Bias is folded into the weight matrix (ones row in the patches), so the
# kernel is a single bf16 MXU matmul + ReLU + lane-dense bf16 store.
#   xt_ref: (K_PAD, T) bf16   wt_ref: (C_FEAT, K_PAD) bf16   o_ref: (C_FEAT, T) bf16
# ---------------------------------------------------------------------------
def _encoder_kernel(xt_ref, wt_ref, o_ref):
    y = jnp.dot(wt_ref[...], xt_ref[...], preferred_element_type=jnp.float32)
    o_ref[...] = jnp.maximum(y, 0.0).astype(o_ref.dtype)


def _pick_frames_per_step(b):
    # Review item: collapse the tiny-encoder grid (merge frames per step) but
    # keep >=2 grid steps so v7x megacore can split the parallel axis.
    for fps in (4, 3, 2):
        if b % fps == 0 and b // fps >= 2:
            return fps
    return 1


def _encode_features(frames_nchw, wt):
    """frames: (B, 3, Hb, Wb) -> features (C_FEAT, B*HW) bf16 (lane-dense)."""
    b = frames_nchw.shape[0]
    # Build im2col directly in (K, pixels) layout: transpose the *small*
    # 3-channel input once, then the 9 shifted slices stack/reshape without
    # ever transposing the 9x-inflated array (review item).
    xc = jnp.transpose(frames_nchw, (1, 0, 2, 3))                 # (3, B, Hb, Wb)
    xp = jnp.pad(xc, ((0, 0), (0, 0), (1, 1), (1, 1)))
    shifts = [xp[:, :, dy:dy + BACKBONE_H, dx:dx + BACKBONE_W]
              for dy in range(3) for dx in range(3)]
    patches = jnp.stack(shifts, axis=0).reshape(K_PATCH, b * HW)  # (27, B*HW)
    ones = jnp.ones((1, b * HW), jnp.float32)                     # bias row
    zpad = jnp.zeros((K_PAD - K_PATCH - 1, b * HW), jnp.float32)  # pad K to 32
    xt = jnp.concatenate([patches, ones, zpad], axis=0).astype(jnp.bfloat16)

    fps = _pick_frames_per_step(b)
    tile = fps * HW
    return pl.pallas_call(
        _encoder_kernel,
        out_shape=jax.ShapeDtypeStruct((C_FEAT, b * HW), jnp.bfloat16),
        grid=(b // fps,),
        in_specs=[
            pl.BlockSpec((K_PAD, tile), lambda i: (0, i)),
            pl.BlockSpec((C_FEAT, K_PAD), lambda i: (0, 0)),
        ],
        out_specs=pl.BlockSpec((C_FEAT, tile), lambda i: (0, i)),
        compiler_params=pltpu.CompilerParams(dimension_semantics=("parallel",)),
    )(xt, wt)


# ---------------------------------------------------------------------------
# Pallas kernel 2: key-tiled online-softmax soft-argmax flow head.
# Grid = (clip, query_tile, key_tile); the key axis is "arbitrary" and carries
# running-max m and running e = [sum p*x; sum p*y; sum p; 0..] accumulators in
# VMEM scratch, so the (HW, HW) correlation volume never materializes.
#   f1_ref: (C, Q_TILE) bf16      query (first-frame) features, lane-dense
#   f2_ref: (1, K_TILE, C) bf16   key (last-frame) features
#   ck_ref: (8, K_TILE) bf16      key coord rows [x, y, 1, 0...] (MXU operand)
#   cq_ref: (8, Q_TILE) f32       query coord rows (exact subtraction)
#   o_ref:  (1, 8, Q_TILE) f32    rows 0-1 = flow, rest ~0 (full-slab store)
#   m_ref:  (1, Q_TILE) f32       running max        (scratch)
#   e_ref:  (8, Q_TILE) f32       running accumulator (scratch)
# 1/sqrt(C) is already folded into the encoder weights (scales both f1, f2).
# NOTE(v5e): if HW grows, set vmem_limit_bytes here (v5e scoped default 16 MiB).
# ---------------------------------------------------------------------------
def _flow_kernel(f1_ref, f2_ref, ck_ref, cq_ref, o_ref, m_ref, e_ref):
    k = pl.program_id(2)

    @pl.when(k == 0)
    def _():
        m_ref[...] = jnp.full_like(m_ref, -jnp.inf)
        e_ref[...] = jnp.zeros_like(e_ref)

    # corr[key, query] = <f2[key], f1[query]>  — both operands bf16, standard
    # MXU dims (keys come in as (K_TILE, C); the tiny (N, HW, C) key transpose
    # is done once in the wrapper rather than re-transposing per (q, k) step).
    corr = jnp.dot(f2_ref[0], f1_ref[...],
                   preferred_element_type=jnp.float32)            # (K_TILE, Q_TILE)

    m_prev = m_ref[...]
    m_new = jnp.maximum(m_prev, jnp.max(corr, axis=0, keepdims=True))
    scale = jnp.exp(m_prev - m_new)                               # (1, Q_TILE)
    # exp in f32 (portable incl. v5e), result cast to bf16 -> native MXU feed.
    p = jnp.exp(corr - m_new).astype(jnp.bfloat16)                # (K_TILE, Q_TILE)
    # One small bf16 matmul folds coordinate weighting + softmax denominator.
    e_ref[...] = scale * e_ref[...] + jnp.dot(
        ck_ref[...], p, preferred_element_type=jnp.float32)       # (8, Q_TILE)
    m_ref[...] = m_new

    @pl.when(k == pl.num_programs(2) - 1)
    def _():
        e = e_ref[...]
        inv = pl.reciprocal(e[2:3, :], approx=True)               # EUP, free slot
        # rows 0-1: soft-argmax position minus query coords = flow;
        # rows 2-7 come out ~0; storing all 8 rows keeps the store sublane-dense.
        o_ref[0] = e * inv - cq_ref[...]


def _soft_argmax_flow(feats, f2, ck, cq, n_clips):
    """feats: (C, 2N*HW) bf16, f2: (N, HW, C) bf16 -> flow slab (N, 8, HW) f32."""
    nq = HW // Q_TILE
    nk = HW // K_TILE
    return pl.pallas_call(
        _flow_kernel,
        out_shape=jax.ShapeDtypeStruct((n_clips, 8, HW), jnp.float32),
        grid=(n_clips, nq, nk),
        in_specs=[
            # queries: first-frame features read straight out of the encoder
            # output (no wrapper reshape/transpose for the query side).
            pl.BlockSpec((C_FEAT, Q_TILE), lambda i, q, k: (0, i * nq + q)),
            pl.BlockSpec((1, K_TILE, C_FEAT), lambda i, q, k: (i, k, 0)),
            pl.BlockSpec((8, K_TILE), lambda i, q, k: (0, k)),
            pl.BlockSpec((8, Q_TILE), lambda i, q, k: (0, q)),
        ],
        out_specs=pl.BlockSpec((1, 8, Q_TILE), lambda i, q, k: (i, 0, q)),
        scratch_shapes=[
            pltpu.VMEM((1, Q_TILE), jnp.float32),   # running max
            pltpu.VMEM((8, Q_TILE), jnp.float32),   # running [sum px, sum py, sum p, ...]
        ],
        compiler_params=pltpu.CompilerParams(
            dimension_semantics=("parallel", "parallel", "arbitrary")),
    )(feats, f2, ck, cq)


def _make_coords():
    yy, xx = jnp.meshgrid(jnp.arange(BACKBONE_H, dtype=jnp.float32),
                          jnp.arange(BACKBONE_W, dtype=jnp.float32), indexing="ij")
    ct = jnp.zeros((8, HW), jnp.float32)
    ct = ct.at[0].set(xx.reshape(-1))
    ct = ct.at[1].set(yy.reshape(-1))
    ct = ct.at[2].set(1.0)
    return ct


# ---------------------------------------------------------------------------
# Parameters: synthetic deterministic conv weights with the input transform,
# bias and correlation scale folded into one (C, K_PAD) bf16 matrix.
# ---------------------------------------------------------------------------
def init_params():
    kw = jax.random.PRNGKey(42)
    w = jax.random.normal(kw, (K_PATCH, C_FEAT), dtype=jnp.float32) / math.sqrt(K_PATCH)
    b = jnp.full((C_FEAT,), 0.01, dtype=jnp.float32)
    # Fold RAFT transform x -> 2x-1:  conv(2x-1) = (2w)^T x + (b - sum_k w[k,:]).
    # Fold correlation scale 1/sqrt(C): each feature map picks up s = C^-1/4
    # (ReLU(s*y) = s*ReLU(y) for s > 0, and the dot picks up s^2).
    s = float(C_FEAT) ** -0.25
    w_eff = (2.0 * s) * w
    b_eff = s * (b - jnp.sum(w, axis=0))
    wt = jnp.zeros((C_FEAT, K_PAD), jnp.float32)
    wt = wt.at[:, :K_PATCH].set(w_eff.T)
    wt = wt.at[:, K_PATCH].set(b_eff)      # bias column <-> ones row in patches
    return {"enc_wt": wt.astype(jnp.bfloat16)}


# ---------------------------------------------------------------------------
# FlowExtractor forward
# ---------------------------------------------------------------------------
def flow_extractor_forward(first_frame, last_frame, params):
    """first_frame, last_frame: (N, 3, H, W) float32 in [0, 1] -> (N, 2, H, W)."""
    n, _, height, width = first_frame.shape

    # pre_process: resize both frames to backbone resolution (the RAFT value
    # transform is folded into the encoder weights).
    frames = jnp.concatenate([first_frame, last_frame], axis=0)
    frames = _resize_bilinear_nchw(frames, BACKBONE_H, BACKBONE_W)

    # feature encoder (Pallas matmul kernel), lane-dense (C, 2N*HW) bf16 output
    feats = _encode_features(frames, params["enc_wt"])

    # Only the key (last-frame) side needs a layout change: a tiny (N, HW, C)
    # bf16 transpose (~96 KB here) so both in-kernel matmuls use standard MXU
    # dims instead of a per-step transposed-LHS feed.
    f2 = jnp.transpose(feats[:, n * HW:].reshape(C_FEAT, n, HW), (1, 2, 0))

    ct = _make_coords()
    flow8 = _soft_argmax_flow(feats, f2, ct.astype(jnp.bfloat16), ct, n)  # (N, 8, HW)
    flow = flow8[:, :2, :].reshape(n, 2, BACKBONE_H, BACKBONE_W)

    # resize estimated flow back to the input resolution (as the module does;
    # like the reference, flow vector magnitudes are NOT rescaled).
    return _resize_bilinear_nchw(flow, height, width)


if __name__ == "__main__":
    key = jax.random.PRNGKey(0)
    k1, k2 = jax.random.split(key)
    N, H, W = 2, 16, 16
    first = jax.random.uniform(k1, (N, 3, H, W), dtype=jnp.float32)
    last = jax.random.uniform(k2, (N, 3, H, W), dtype=jnp.float32)

    params = init_params()
    flows = flow_extractor_forward(first, last, params)
    flows = jax.block_until_ready(flows)

    assert flows.shape == (N, 2, H, W), flows.shape
    assert flows.dtype == jnp.float32
    assert bool(jnp.all(jnp.isfinite(flows)))
    print("KERNEL_OK")
</pallas_src>

<mosaic_0001>
module attributes {stable_mosaic.version = 11 : i64} {
  func.func @_encoder_kernel(%arg0: i32, %arg1: memref<32x1536xbf16, #tpu.memory_space<vmem>>, %arg2: memref<32x32xbf16, #tpu.memory_space<vmem>>, %arg3: memref<32x1536xbf16, #tpu.memory_space<vmem>>) attributes {dimension_semantics = [#tpu.dimension_semantics<parallel>], iteration_bounds = array<i64: 2>, scalar_prefetch = 0 : i64, scratch_operands = 0 : i64, tpu.core_type = #tpu.core_type<tc>, window_params = [{transform_indices = @transform_0, window_bounds = array<i64: 32, 1536>}, {pipeline_mode = #tpu.pipeline_mode<synchronous>, transform_indices = @transform_1, window_bounds = array<i64: 32, 32>}, {transform_indices = @transform_2, window_bounds = array<i64: 32, 1536>}]} {
    %c0 = arith.constant 0 : index
    %c0_0 = arith.constant 0 : index
    %0 = vector.load %arg2[%c0, %c0_0] : memref<32x32xbf16, #tpu.memory_space<vmem>>, vector<32x32xbf16>
    %c0_1 = arith.constant 0 : index
    %c0_2 = arith.constant 0 : index
    %1 = vector.load %arg1[%c0_1, %c0_2] : memref<32x1536xbf16, #tpu.memory_space<vmem>>, vector<32x1536xbf16>
    %cst = arith.constant dense<0.000000e+00> : vector<32x1536xf32>
    %2 = tpu.matmul %0, %1, %cst {dimension_numbers = #tpu.dot_dimension_numbers<[1], [0], [0], [1], [0, 0, 1, 1], [], []>} : vector<32x32xbf16>, vector<32x1536xbf16>, vector<32x1536xf32> -> vector<32x1536xf32>
    %cst_3 = arith.constant 0.000000e+00 : f32
    %3 = vector.broadcast %cst_3 : f32 to vector<32x1536xf32>
    %4 = arith.maximumf %2, %3 : vector<32x1536xf32>
    %5 = arith.truncf %4 : vector<32x1536xf32> to vector<32x1536xbf16>
    %c0_4 = arith.constant 0 : index
    %c0_5 = arith.constant 0 : index
    %6 = vector.load %arg3[%c0_4, %c0_5] : memref<32x1536xbf16, #tpu.memory_space<vmem>>, vector<32x1536xbf16>
    tpu.vector_store %arg3[%c0_4, %c0_5], %5 {strides = array<i32>} : memref<32x1536xbf16, #tpu.memory_space<vmem>>, vector<32x1536xbf16>,
    return
  }
  func.func @transform_0(%arg0: i32) -> (i32, i32) {
    %c0_i32 = arith.constant 0 : i32
    %c0_i32_0 = arith.constant 0 : i32
    return %c0_i32, %arg0 : i32, i32
  }
  func.func @transform_1(%arg0: i32) -> (i32, i32) {
    %c0_i32 = arith.constant 0 : i32
    %c0_i32_0 = arith.constant 0 : i32
    %c0_i32_1 = arith.constant 0 : i32
    return %c0_i32, %c0_i32_0 : i32, i32
  }
  func.func @transform_2(%arg0: i32) -> (i32, i32) {
    %c0_i32 = arith.constant 0 : i32
    %c0_i32_0 = arith.constant 0 : i32
    return %c0_i32, %arg0 : i32, i32
  }
}

</mosaic_0001>

<llo_original>
// kernel: tpu_custom_call.1
$region0: #{tpu_custom_call.1}
  #allocation0 [shape = 'u32[]', space=smem, size = 0x4, offset = 0x4, fixed_abs, tag = 'smem constant byte address 0x4 - core index']
  #allocation1 [shape = 'u32[144,128]{1,0:T(1,128)}', space=vmem, size = 0x12000, scoped, tag = 'internal scratch']
  %s0 = inlined_call_operand.hbm [shape: bf16[32,3072], index: 0, kind: input, shape index: {}]
  %s1 = inlined_call_operand.hbm [shape: bf16[32,32], index: 1, kind: input, shape index: {}]
  %s2 = inlined_call_operand.hbm [shape: bf16[32,3072], index: 2, kind: output, shape index: {}]
  %s3 = sld [smem:[#allocation0]]
  $region49: #{tpu_custom_call.1} parent=0
    _
  %s5 = ssub.s32 1, %s3
  %s6 = scalar_select 0, %s5, %s3
  $region1: #{tpu_custom_call.1} parent=0
    #allocation2 [shape = 'u8[196608]{0}', space=vmem, size = 0x30000, scoped, tag = 'input window, operand 0']
    #allocation3 [shape = 's32[2]{0}', space=sflag, size = 0x8, scoped, tag = 'scoped memory for tpu_custom_call.1']
    #allocation4 [shape = 's32[2]{0}', space=sflag, size = 0x8, scoped, tag = 'scoped memory for tpu_custom_call.1']
    #allocation5 [shape = 'u8[8192]{0}', space=vmem, size = 0x2000, scoped, tag = 'input window, operand 1, single buffered']
    #allocation6 [shape = 's32[1]{0}', space=sflag, size = 0x4, scoped, tag = 'scoped memory for tpu_custom_call.1']
    #allocation7 [shape = 'u8[196608]{0}', space=vmem, size = 0x30000, scoped, tag = 'output window, operand 0']
    %7 = vsyncpa [#allocation3], 0
    %s8 = scalar_lea.sflag [#allocation3], 1
    %9 = vsyncpa %s8, 0
    %10 = vsyncpa [#allocation6], 0
    %11 = vsyncpa [#allocation4], 0
    %s12 = scalar_lea.sflag [#allocation4], 1
    %13 = vsyncpa %s12, 0
    loop: start=0, step=1, limit=4
    $region2: #{tpu_custom_call.1} parent=1 // loop_pre_header
      _
    $region3: #{tpu_custom_call.1} parent=1 // loop_header
      %s15 = sphi 0, %s19
      %p16 = scmp.ge.s32.totalorder %s15, 4
      %s25 = sphi 0, %s27
      %s28 = sphi 0, %s25
      %s29 = sphi 0, %s28
      %s45 = sphi 0, %s29
      %s49 = sphi 0, %s49
      %s51 = sphi 0, %s49
      %s52 = sphi 0, %s51
      %s66 = sphi 0, %s52
      %s72 = sphi 0, %s74
      %s75 = sphi 0, %s72
      %s76 = sphi 0, %s75
      %s92 = sphi 0, %s76
    $region4: #{tpu_custom_call.1} parent=1 // loop_header_branch
      %18 = sbr.rel (%p16) target = $region8
    $region5: #{tpu_custom_call.1} parent=1 // loop_body
      %s20 = ssub.s32 %s15, 1
      %s21 = ssub.s32 %s15, 2
      %s22 = sadd.s32 %s15, 1
      %s23 = ssub.s32 %s15, %s22
      %p24 = scmp.eq.s32.totalorder %s23, 0
      %s26 = sadd.s32 %s25, 1
      %s27 = scalar_select %p24, %s25, %s26
      %p30 = pneg %p24
      %p31 = scmp.eq.s32.totalorder %s15, 1
      %p32 = por %p30, %p31
      %p33 = scmp.ne.s32.totalorder %s25, %s28
      %p34 = scmp.eq.s32.totalorder %s15, 0
      %p35 = por %p33, %p34
      %p36 = scmp.ne.s32.totalorder %s25, %s28
      %p37 = scmp.eq.s32.totalorder %s20, 1
      %p38 = por %p36, %p37
      %p39 = scmp.ne.s32.totalorder %s28, %s29
      %p40 = scmp.eq.s32.totalorder %s20, 0
      %p41 = por %p39, %p40
      %p42 = scmp.ne.s32.totalorder %s28, %s29
      %p43 = scmp.eq.s32.totalorder %s21, 1
      %p44 = por %p42, %p43
      %p46 = scmp.ne.s32.totalorder %s29, %s45
      %p47 = scmp.eq.s32.totalorder %s21, 0
      %p48 = por %p46, %p47
      %s50 = sadd.s32 %s49, 1
      %p53 = scmp.eq.s32.totalorder %s15, 1
      %p54 = scmp.ne.s32.totalorder %s49, %s51
      %p55 = scmp.eq.s32.totalorder %s15, 0
      %p56 = por %p54, %p55
      %p57 = scmp.ne.s32.totalorder %s49, %s51
      %p58 = scmp.eq.s32.totalorder %s20, 1
      %p59 = por %p57, %p58
      %p60 = scmp.ne.s32.totalorder %s51, %s52
      %p61 = scmp.eq.s32.totalorder %s20, 0
      %p62 = por %p60, %p61
      %p63 = scmp.ne.s32.totalorder %s51, %s52
      %p64 = scmp.eq.s32.totalorder %s21, 1
      %p65 = por %p63, %p64
      %p67 = scmp.ne.s32.totalorder %s52, %s66
      %p68 = scmp.eq.s32.totalorder %s21, 0
      %p69 = por %p67, %p68
      %s70 = ssub.s32 %s15, %s22
      %p71 = scmp.eq.s32.totalorder %s70, 0
      %s73 = sadd.s32 %s72, 1
      %s74 = scalar_select %p71, %s72, %s73
      %p77 = pneg %p71
      %p78 = scmp.eq.s32.totalorder %s15, 1
      %p79 = por %p77, %p78
      %p80 = scmp.ne.s32.totalorder %s72, %s75
      %p81 = scmp.eq.s32.totalorder %s15, 0
      %p82 = por %p80, %p81
      %p83 = scmp.ne.s32.totalorder %s72, %s75
      %p84 = scmp.eq.s32.totalorder %s20, 1
      %p85 = por %p83, %p84
      %p86 = scmp.ne.s32.totalorder %s75, %s76
      %p87 = scmp.eq.s32.totalorder %s20, 0
      %p88 = por %p86, %p87
      %p89 = scmp.ne.s32.totalorder %s75, %s76
      %p90 = scmp.eq.s32.totalorder %s21, 1
      %p91 = por %p89, %p90
      %p93 = scmp.ne.s32.totalorder %s76, %s92
      %p94 = scmp.eq.s32.totalorder %s21, 0
      %p95 = por %p93, %p94
      %p96 = scmp.le.s32.totalorder 1, %s15
      %p97 = scmp.lt.s32.totalorder %s15, 3
      %p98 = pnand %p96, %p97
      %p99 = pneg %p98
      // Predicated region
      $region9: #{tpu_custom_call.1} parent=5 // pred_check
        _
      $region10: #{tpu_custom_call.1} parent=5 // pred_check_branch
        %101 = sbr.rel (%p98) target = $region12
      $region11: #{tpu_custom_call.1} parent=5 // pred_region
        %s102 = ssub.s32 %s15, 1
        // Predicated region
        $region13: #{tpu_custom_call.1} parent=11 // pred_check
          %p103 = pneg %p62
        $region14: #{tpu_custom_call.1} parent=11 // pred_check_branch
          %105 = sbr.rel (%p103) target = $region16
        $region15: #{tpu_custom_call.1} parent=11 // pred_region
          %s107 = ssub.s32 256, 256
          %108 = vsyncadd [#allocation6], %s107
          %s109 = sshll.u32 [#allocation5], 4
          %s110 = int_to_ptr.vmem [resolvable:$true] %s109
          %115 = dma.hbm_to_vmem [thread:$0]  %s1, 256, %s110, [#allocation6], 64, 64, 4
        $region16: #{tpu_custom_call.1} parent=11 // pred_fallthru
          _
      $region12: #{tpu_custom_call.1} parent=5 // pred_fallthru
        _
      %p116 = scmp.lt.s32.totalorder %s15, 2
      // Predicated region
      $region17: #{tpu_custom_call.1} parent=5 // pred_check
        %p117 = pneg %p116
      $region18: #{tpu_custom_call.1} parent=5 // pred_check_branch
        %119 = sbr.rel (%p117) target = $region20
      $region19: #{tpu_custom_call.1} parent=5 // pred_region
        // Predicated region
        $region21: #{tpu_custom_call.1} parent=19 // pred_check
          %p120 = pneg %p35
        $region22: #{tpu_custom_call.1} parent=19 // pred_check_branch
          %122 = sbr.rel (%p120) target = $region24
        $region23: #{tpu_custom_call.1} parent=19 // pred_region
          %s123 = sand.u32 %s25, 1
          %s124 = scalar_lea.sflag [#allocation3], %s123
          %s125 = sand.u32 %s25, 1
          %s126 = smul.addr %s125, 192
          %s127 = scalar_lea.vmem [#allocation2], %s126
          %s128 = smul.u32 12, %s15
          %s130 = ssub.s32 3072, 3072
          %131 = vsyncadd %s124, %s130
          %s132 = smul.addr %s128, 64
          %s133 = scalar_lea.hbm %s0, %s132
          %s134 = sshll.u32 %s127, 4
          %s135 = int_to_ptr.vmem [resolvable:$true] %s134
          %140 = dma.hbm_to_vmem [thread:$0]  %s133, 3072, %s135, %s124, 1536, 768, 48
        $region24: #{tpu_custom_call.1} parent=19 // pred_fallthru
          _
      $region20: #{tpu_custom_call.1} parent=5 // pred_fallthru
        _
      %p141 = scmp.le.s32.totalorder 1, %s15
      %p142 = scmp.lt.s32.totalorder %s15, 3
      %p143 = pnand %p141, %p142
      %p144 = pneg %p143
      // Predicated region
      $region25: #{tpu_custom_call.1} parent=5 // pred_check
        _
      $region26: #{tpu_custom_call.1} parent=5 // pred_check_branch
        %146 = sbr.rel (%p143) target = $region28
      $region27: #{tpu_custom_call.1} parent=5 // pred_region
        %s147 = ssub.s32 %s15, 1
        %s148 = sand.u32 %s28, 1
        %s149 = scalar_lea.sflag [#allocation3], %s148
        %s150 = sand.u32 %s28, 1
        %s151 = smul.addr %s150, 192
        %s152 = scalar_lea.vmem [#allocation2], %s151
        // Predicated region
        $region29: #{tpu_custom_call.1} parent=27 // pred_check
          %p153 = pneg %p41
        $region30: #{tpu_custom_call.1} parent=27 // pred_check_branch
          %155 = sbr.rel (%p153) target = $region32
        $region31: #{tpu_custom_call.1} parent=27 // pred_region
          %156 = dma.done %s149, 3072
        $region32: #{tpu_custom_call.1} parent=27 // pred_fallthru
          _
        // Predicated region
        $region33: #{tpu_custom_call.1} parent=27 // pred_check
          %p157 = pneg %p62
        $region34: #{tpu_custom_call.1} parent=27 // pred_check_branch
          %159 = sbr.rel (%p157) target = $region36
        $region35: #{tpu_custom_call.1} parent=27 // pred_region
          %160 = dma.done [#allocation6], 256
        $region36: #{tpu_custom_call.1} parent=27 // pred_fallthru
          _
        %s161 = sand.u32 %s28, 1
        %s162 = scalar_lea.sflag [#allocation3], %s161
        %s163 = sand.u32 %s28, 1
        %s164 = smul.addr %s163, 192
        %s165 = scalar_lea.vmem [#allocation2], %s164
        %p166 = pneg %p41
        %p167 = pneg %p38
        %p168 = pneg %p62
        %p169 = pneg %p59
        %p170 = pneg %p88
        %p171 = pneg %p85
        %s172 = sand.u32 %s75, 1
        %s173 = scalar_lea.sflag [#allocation4], %s172
        %s174 = sand.u32 %s75, 1
        %s175 = smul.addr %s174, 192
        %s176 = scalar_lea.vmem [#allocation7], %s175
        %s177 = smul.u32 12, %s20
        %s178 = smul.u32 12, %s20
        %v180 = vld [vmem:[#allocation5] sm:$0xf]
        %v181 = vld [vmem:[#allocation5 + $0x4] sm:$0xf]
        %v182 = vld [vmem:[#allocation5 + $0x8] sm:$0xf]
        %v183 = vld [vmem:[#allocation5 + $0xc] sm:$0xf]
        %v184 = vld [vmem:[%s152] sm:$0xff]
        %v185 = vld [vmem:[%s152 + $0x8] sm:$0xff]
        %v186 = vld [vmem:[%s152 + $0x10] sm:$0xff]
        %v187 = vld [vmem:[%s152 + $0x18] sm:$0xff]
        %v188 = vld [vmem:[%s152 + $0x20] sm:$0xff]
        %v189 = vld [vmem:[%s152 + $0x28] sm:$0xff]
        %v190 = vld [vmem:[%s152 + $0x30] sm:$0xff]
        %v191 = vld [vmem:[%s152 + $0x38] sm:$0xff]
        %v192 = vld [vmem:[%s152 + $0x40] sm:$0xff]
        %v193 = vld [vmem:[%s152 + $0x48] sm:$0xff]
        %v194 = vld [vmem:[%s152 + $0x50] sm:$0xff]
        %v195 = vld [vmem:[%s152 + $0x58] sm:$0xff]
        %v196 = vld [vmem:[%s152 + $0x60] sm:$0xff]
        %v197 = vld [vmem:[%s152 + $0x68] sm:$0xff]
        %v198 = vld [vmem:[%s152 + $0x70] sm:$0xff]
        %v199 = vld [vmem:[%s152 + $0x78] sm:$0xff]
        %v200 = vld [vmem:[%s152 + $0x80] sm:$0xff]
        %v201 = vld [vmem:[%s152 + $0x88] sm:$0xff]
        %v202 = vld [vmem:[%s152 + $0x90] sm:$0xff]
        %v203 = vld [vmem:[%s152 + $0x98] sm:$0xff]
        %v204 = vld [vmem:[%s152 + $0xa0] sm:$0xff]
        %v205 = vld [vmem:[%s152 + $0xa8] sm:$0xff]
        %v206 = vld [vmem:[%s152 + $0xb0] sm:$0xff]
        %v207 = vld [vmem:[%s152 + $0xb8] sm:$0xff]
        %v212 = vunpack.c.l.b16 %v180
        %v213 = vunpack.c.l.b16 %v181
        %v214 = vunpack.c.l.b16 %v182
        %v215 = vunpack.c.l.b16 %v183
        %v216 = vpack.c.b16 %v213, %v212
        %v217 = vpack.c.b16 %v215, %v214
        %v242 = vunpack.c.l.b16 %v184
        %v243 = vunpack.c.h.b16 %v184
        %v244 = vunpack.c.l.b16 %v185
        %v245 = vunpack.c.h.b16 %v185
        %v246 = vunpack.c.l.b16 %v186
        %v247 = vunpack.c.h.b16 %v186
        %v248 = vunpack.c.l.b16 %v187
        %v249 = vunpack.c.h.b16 %v187
        %v250 = vunpack.c.l.b16 %v188
        %v251 = vunpack.c.h.b16 %v188
        %v252 = vunpack.c.l.b16 %v189
        %v253 = vunpack.c.h.b16 %v189
        %v254 = vunpack.c.l.b16 %v190
        %v255 = vunpack.c.h.b16 %v190
        %v256 = vunpack.c.l.b16 %v191
        %v257 = vunpack.c.h.b16 %v191
        %v258 = vunpack.c.l.b16 %v192
        %v259 = vunpack.c.h.b16 %v192
        %v260 = vunpack.c.l.b16 %v193
        %v261 = vunpack.c.h.b16 %v193
        %v262 = vunpack.c.l.b16 %v194
        %v263 = vunpack.c.h.b16 %v194
        %v264 = vunpack.c.l.b16 %v195
        %v265 = vunpack.c.h.b16 %v195
        %v266 = vunpack.c.l.b16 %v196
        %v267 = vunpack.c.h.b16 %v196
        %v268 = vunpack.c.l.b16 %v197
        %v269 = vunpack.c.h.b16 %v197
        %v270 = vunpack.c.l.b16 %v198
        %v271 = vunpack.c.h.b16 %v198
        %v272 = vunpack.c.l.b16 %v199
        %v273 = vunpack.c.h.b16 %v199
        %v274 = vunpack.c.l.b16 %v200
        %v275 = vunpack.c.h.b16 %v200
        %v276 = vunpack.c.l.b16 %v201
        %v277 = vunpack.c.h.b16 %v201
        %v278 = vunpack.c.l.b16 %v202
        %v279 = vunpack.c.h.b16 %v202
        %v280 = vunpack.c.l.b16 %v203
        %v281 = vunpack.c.h.b16 %v203
        %v282 = vunpack.c.l.b16 %v204
        %v283 = vunpack.c.h.b16 %v204
        %v284 = vunpack.c.l.b16 %v205
        %v285 = vunpack.c.h.b16 %v205
        %v286 = vunpack.c.l.b16 %v206
        %v287 = vunpack.c.h.b16 %v206
        %v288 = vunpack.c.l.b16 %v207
        %v289 = vunpack.c.h.b16 %v207
        %v290 = vpack.c.b16 %v254, %v242
        %v291 = vpack.c.b16 %v255, %v243
        %v292 = vpack.c.b16 %v256, %v244
        %v293 = vpack.c.b16 %v257, %v245
        %v294 = vpack.c.b16 %v258, %v246
        %v295 = vpack.c.b16 %v259, %v247
        %v296 = vpack.c.b16 %v260, %v248
        %v297 = vpack.c.b16 %v261, %v249
        %v298 = vpack.c.b16 %v262, %v250
        %v299 = vpack.c.b16 %v263, %v251
        %v300 = vpack.c.b16 %v264, %v252
        %v301 = vpack.c.b16 %v265, %v253
        %v302 = vpack.c.b16 %v278, %v266
        %v303 = vpack.c.b16 %v279, %v267
        %v304 = vpack.c.b16 %v280, %v268
        %v305 = vpack.c.b16 %v281, %v269
        %v306 = vpack.c.b16 %v282, %v270
        %v307 = vpack.c.b16 %v283, %v271
        %v308 = vpack.c.b16 %v284, %v272
        %v309 = vpack.c.b16 %v285, %v273
        %v310 = vpack.c.b16 %v286, %v274
        %v311 = vpack.c.b16 %v287, %v275
        %v312 = vpack.c.b16 %v288, %v276
        %v313 = vpack.c.b16 %v289, %v277
        %vm338 = vcmask 261120
        %v340 = vsel %vm338, %v216, 0
        %v343 = vsel %vm338, %v217, 0
        %345 = vmatprep.subr.bf16.mxu0 %v291
        %346 = vmatpush1.bf16.msra.mxu0 %v290
        %347 = vmatprep.subr.bf16.mxu0 %v303
        %348 = vmatpush1.bf16.msra.mxu0 %v302
        %349 = vmatprep.subr.bf16.mxu0 0
        %350 = vmatpush1.bf16.msra.mxu0 0
        %351 = vmatprep.subr.bf16.mxu0 0
        %352 = vmatpush1.bf16.msra.mxu0 0
        %353 = vmatprep.subr.bf16.mxu0 0
        %354 = vmatpush1.bf16.msra.mxu0 0
        %355 = vmatprep.subr.bf16.mxu0 0
        %356 = vmatpush1.bf16.msra.mxu0 0
        %357 = vmatprep.subr.bf16.mxu0 0
        %358 = vmatpush1.bf16.msra.mxu0 0
        %359 = vmatprep.subr.bf16.mxu0 0
        %360 = vmatpush1.bf16.msra.mxu0 0
        %361 = vmatprep.subr.bf16.mxu0 0
        %362 = vmatpush1.bf16.msra.mxu0 0
        %363 = vmatprep.subr.bf16.mxu0 0
        %364 = vmatpush1.bf16.msra.mxu0 0
        %365 = vmatprep.subr.bf16.mxu0 0
        %366 = vmatpush1.bf16.msra.mxu0 0
        %367 = vmatprep.subr.bf16.mxu0 0
        %368 = vmatpush1.bf16.msra.mxu0 0
        %369 = vmatprep.subr.bf16.mxu0 0
        %370 = vmatpush1.bf16.msra.mxu0 0
        %371 = vmatprep.subr.bf16.mxu0 0
        %372 = vmatpush1.bf16.msra.mxu0 0
        %373 = vmatprep.subr.bf16.mxu0 0
        %374 = vmatpush1.bf16.msra.mxu0 0
        %375 = vmatprep.subr.bf16.mxu0 0
        %376 = vmatpush1.bf16.msra.mxu0 0
        %377 = vmatprep.mubr.bf16.mxu0 0
        %378 = vmatmul.mubr.bf16.gmra.mrb[0].mxu0 %v340
        %v379 = vpop.f32.mrb[0].mxu0
        %v380 = vadd.f32 0.0, %v379
        %v381 = vpop.f32.mrb[0].mxu0
        %v382 = vadd.f32 0.0, %v381
        %v383 = vpop.f32.mrb[0].mxu0
        %v384 = vadd.f32 0.0, %v383
        %v385 = vpop.f32.mrb[0].mxu0
        %v386 = vadd.f32 0.0, %v385
        %387 = vmatprep.mubr.bf16.mxu0 0
        %388 = vmatmul.mubr.bf16.gmra.mrb[0].mxu0 %v343
        %v389 = vpop.f32.mrb[0].mxu0
        %v390 = vadd.f32 0.0, %v389
        %v391 = vpop.f32.mrb[0].mxu0
        %v392 = vadd.f32 0.0, %v391
        %v393 = vpop.f32.mrb[0].mxu0
        %v394 = vadd.f32 0.0, %v393
        %v395 = vpop.f32.mrb[0].mxu0
        %v396 = vadd.f32 0.0, %v395
        %397 = vdwg.mxu0
        %398 = vmatprep.subr.bf16.mxu0 %v293
        %399 = vmatpush1.bf16.msra.mxu0 %v292
        %400 = vmatprep.subr.bf16.mxu0 %v305
        %401 = vmatpush1.bf16.msra.mxu0 %v304
        %402 = vmatprep.subr.bf16.mxu0 0
        %403 = vmatpush1.bf16.msra.mxu0 0
        %404 = vmatprep.subr.bf16.mxu0 0
        %405 = vmatpush1.bf16.msra.mxu0 0
        %406 = vmatprep.subr.bf16.mxu0 0
        %407 = vmatpush1.bf16.msra.mxu0 0
        %408 = vmatprep.subr.bf16.mxu0 0
        %409 = vmatpush1.bf16.msra.mxu0 0
        %410 = vmatprep.subr.bf16.mxu0 0
        %411 = vmatpush1.bf16.msra.mxu0 0
        %412 = vmatprep.subr.bf16.mxu0 0
        %413 = vmatpush1.bf16.msra.mxu0 0
        %414 = vmatprep.subr.bf16.mxu0 0
        %415 = vmatpush1.bf16.msra.mxu0 0
        %416 = vmatprep.subr.bf16.mxu0 0
        %417 = vmatpush1.bf16.msra.mxu0 0
        %418 = vmatprep.subr.bf16.mxu0 0
        %419 = vmatpush1.bf16.msra.mxu0 0
        %420 = vmatprep.subr.bf16.mxu0 0
        %421 = vmatpush1.bf16.msra.mxu0 0
        %422 = vmatprep.subr.bf16.mxu0 0
        %423 = vmatpush1.bf16.msra.mxu0 0
        %424 = vmatprep.subr.bf16.mxu0 0
        %425 = vmatpush1.bf16.msra.mxu0 0
        %426 = vmatprep.subr.bf16.mxu0 0
        %427 = vmatpush1.bf16.msra.mxu0 0
        %428 = vmatprep.subr.bf16.mxu0 0
        %429 = vmatpush1.bf16.msra.mxu0 0
        %430 = vmatprep.mubr.bf16.mxu0 0
        %431 = vmatmul.mubr.bf16.gmra.mrb[0].mxu0 %v340
        %v432 = vpop.f32.mrb[0].mxu0
        %v433 = vadd.f32 0.0, %v432
        %v434 = vpop.f32.mrb[0].mxu0
        %v435 = vadd.f32 0.0, %v434
        %v436 = vpop.f32.mrb[0].mxu0
        %v437 = vadd.f32 0.0, %v436
        %v438 = vpop.f32.mrb[0].mxu0
        %v439 = vadd.f32 0.0, %v438
        %440 = vmatprep.mubr.bf16.mxu0 0
        %441 = vmatmul.mubr.bf16.gmra.mrb[0].mxu0 %v343
        %v442 = vpop.f32.mrb[0].mxu0
        %v443 = vadd.f32 0.0, %v442
        %v444 = vpop.f32.mrb[0].mxu0
        %v445 = vadd.f32 0.0, %v444
        %v446 = vpop.f32.mrb[0].mxu0
        %v447 = vadd.f32 0.0, %v446
        %v448 = vpop.f32.mrb[0].mxu0
        %v449 = vadd.f32 0.0, %v448
        %450 = vdwg.mxu0
        %451 = vmatprep.subr.bf16.mxu0 %v295
        %452 = vmatpush1.bf16.msra.mxu0 %v294
        %453 = vmatprep.subr.bf16.mxu0 %v307
        %454 = vmatpush1.bf16.msra.mxu0 %v306
        %455 = vmatprep.subr.bf16.mxu0 0
        %456 = vmatpush1.bf16.msra.mxu0 0
        %457 = vmatprep.subr.bf16.mxu0 0
        %458 = vmatpush1.bf16.msra.mxu0 0
        %459 = vmatprep.subr.bf16.mxu0 0
        %460 = vmatpush1.bf16.msra.mxu0 0
        %461 = vmatprep.subr.bf16.mxu0 0
        %462 = vmatpush1.bf16.msra.mxu0 0
        %463 = vmatprep.subr.bf16.mxu0 0
        %464 = vmatpush1.bf16.msra.mxu0 0
        %465 = vmatprep.subr.bf16.mxu0 0
        %466 = vmatpush1.bf16.msra.mxu0 0
        %467 = vmatprep.subr.bf16.mxu0 0
        %468 = vmatpush1.bf16.msra.mxu0 0
        %469 = vmatprep.subr.bf16.mxu0 0
        %470 = vmatpush1.bf16.msra.mxu0 0
        %471 = vmatprep.subr.bf16.mxu0 0
        %472 = vmatpush1.bf16.msra.mxu0 0
        %473 = vmatprep.subr.bf16.mxu0 0
        %474 = vmatpush1.bf16.msra.mxu0 0
        %475 = vmatprep.subr.bf16.mxu0 0
        %476 = vmatpush1.bf16.msra.mxu0 0
        %477 = vmatprep.subr.bf16.mxu0 0
        %478 = vmatpush1.bf16.msra.mxu0 0
        %479 = vmatprep.subr.bf16.mxu0 0
        %480 = vmatpush1.bf16.msra.mxu0 0
        %481 = vmatprep.subr.bf16.mxu0 0
        %482 = vmatpush1.bf16.msra.mxu0 0
        %483 = vmatprep.mubr.bf16.mxu0 0
        %484 = vmatmul.mubr.bf16.gmra.mrb[0].mxu0 %v340
        %v485 = vpop.f32.mrb[0].mxu0
        %v486 = vadd.f32 0.0, %v485
        %v487 = vpop.f32.mrb[0].mxu0
        %v488 = vadd.f32 0.0, %v487
        %v489 = vpop.f32.mrb[0].mxu0
        %v490 = vadd.f32 0.0, %v489
        %v491 = vpop.f32.mrb[0].mxu0
        %v492 = vadd.f32 0.0, %v491
        %493 = vmatprep.mubr.bf16.mxu0 0
        %494 = vmatmul.mubr.bf16.gmra.mrb[0].mxu0 %v343
        %v495 = vpop.f32.mrb[0].mxu0
        %v496 = vadd.f32 0.0, %v495
        %v497 = vpop.f32.mrb[0].mxu0
        %v498 = vadd.f32 0.0, %v497
        %v499 = vpop.f32.mrb[0].mxu0
        %v500 = vadd.f32 0.0, %v499
        %v501 = vpop.f32.mrb[0].mxu0
        %v502 = vadd.f32 0.0, %v501
        %503 = vdwg.mxu0
        %504 = vmatprep.subr.bf16.mxu0 %v297
        %505 = vmatpush1.bf16.msra.mxu0 %v296
        %506 = vmatprep.subr.bf16.mxu0 %v309
        %507 = vmatpush1.bf16.msra.mxu0 %v308
        %508 = vmatprep.subr.bf16.mxu0 0
        %509 = vmatpush1.bf16.msra.mxu0 0
        %510 = vmatprep.subr.bf16.mxu0 0
        %511 = vmatpush1.bf16.msra.mxu0 0
        %512 = vmatprep.subr.bf16.mxu0 0
        %513 = vmatpush1.bf16.msra.mxu0 0
        %514 = vmatprep.subr.bf16.mxu0 0
        %515 = vmatpush1.bf16.msra.mxu0 0
        %516 = vmatprep.subr.bf16.mxu0 0
        %517 = vmatpush1.bf16.msra.mxu0 0
        %518 = vmatprep.subr.bf16.mxu0 0
        %519 = vmatpush1.bf16.msra.mxu0 0
        %520 = vmatprep.subr.bf16.mxu0 0
        %521 = vmatpush1.bf16.msra.mxu0 0
        %522 = vmatprep.subr.bf16.mxu0 0
        %523 = vmatpush1.bf16.msra.mxu0 0
        %524 = vmatprep.subr.bf16.mxu0 0
        %525 = vmatpush1.bf16.msra.mxu0 0
        %526 = vmatprep.subr.bf16.mxu0 0
        %527 = vmatpush1.bf16.msra.mxu0 0
        %528 = vmatprep.subr.bf16.mxu0 0
        %529 = vmatpush1.bf16.msra.mxu0 0
        %530 = vmatprep.subr.bf16.mxu0 0
        %531 = vmatpush1.bf16.msra.mxu0 0
        %532 = vmatprep.subr.bf16.mxu0 0
        %533 = vmatpush1.bf16.msra.mxu0 0
        %534 = vmatprep.subr.bf16.mxu0 0
        %535 = vmatpush1.bf16.msra.mxu0 0
        %536 = vmatprep.mubr.bf16.mxu0 0
        %537 = vmatmul.mubr.bf16.gmra.mrb[0].mxu0 %v340
        %v538 = vpop.f32.mrb[0].mxu0
        %v539 = vadd.f32 0.0, %v538
        %v540 = vpop.f32.mrb[0].mxu0
        %v541 = vadd.f32 0.0, %v540
        %v542 = vpop.f32.mrb[0].mxu0
        %v543 = vadd.f32 0.0, %v542
        %v544 = vpop.f32.mrb[0].mxu0
        %v545 = vadd.f32 0.0, %v544
        %546 = vmatprep.mubr.bf16.mxu0 0
        %547 = vmatmul.mubr.bf16.gmra.mrb[0].mxu0 %v343
        %v548 = vpop.f32.mrb[0].mxu0
        %v549 = vadd.f32 0.0, %v548
        %v550 = vpop.f32.mrb[0].mxu0
        %v551 = vadd.f32 0.0, %v550
        %v552 = vpop.f32.mrb[0].mxu0
        %v553 = vadd.f32 0.0, %v552
        %v554 = vpop.f32.mrb[0].mxu0
        %v555 = vadd.f32 0.0, %v554
        %556 = vdwg.mxu0
        %557 = vmatprep.subr.bf16.mxu0 %v299
        %558 = vmatpush1.bf16.msra.mxu0 %v298
        %559 = vmatprep.subr.bf16.mxu0 %v311
        %560 = vmatpush1.bf16.msra.mxu0 %v310
        %561 = vmatprep.subr.bf16.mxu0 0
        %562 = vmatpush1.bf16.msra.mxu0 0
        %563 = vmatprep.subr.bf16.mxu0 0
        %564 = vmatpush1.bf16.msra.mxu0 0
        %565 = vmatprep.subr.bf16.mxu0 0
        %566 = vmatpush1.bf16.msra.mxu0 0
        %567 = vmatprep.subr.bf16.mxu0 0
        %568 = vmatpush1.bf16.msra.mxu0 0
        %569 = vmatprep.subr.bf16.mxu0 0
        %570 = vmatpush1.bf16.msra.mxu0 0
        %571 = vmatprep.subr.bf16.mxu0 0
        %572 = vmatpush1.bf16.msra.mxu0 0
        %573 = vmatprep.subr.bf16.mxu0 0
        %574 = vmatpush1.bf16.msra.mxu0 0
        %575 = vmatprep.subr.bf16.mxu0 0
        %576 = vmatpush1.bf16.msra.mxu0 0
        %577 = vmatprep.subr.bf16.mxu0 0
        %578 = vmatpush1.bf16.msra.mxu0 0
        %579 = vmatprep.subr.bf16.mxu0 0
        %580 = vmatpush1.bf16.msra.mxu0 0
        %581 = vmatprep.subr.bf16.mxu0 0
        %582 = vmatpush1.bf16.msra.mxu0 0
        %583 = vmatprep.subr.bf16.mxu0 0
        %584 = vmatpush1.bf16.msra.mxu0 0
        %585 = vmatprep.subr.bf16.mxu0 0
        %586 = vmatpush1.bf16.msra.mxu0 0
        %587 = vmatprep.subr.bf16.mxu0 0
        %588 = vmatpush1.bf16.msra.mxu0 0
        %589 = vmatprep.mubr.bf16.mxu0 0
        %590 = vmatmul.mubr.bf16.gmra.mrb[0].mxu0 %v340
        %v591 = vpop.f32.mrb[0].mxu0
        %v592 = vadd.f32 0.0, %v591
        %v593 = vpop.f32.mrb[0].mxu0
        %v594 = vadd.f32 0.0, %v593
        %v595 = vpop.f32.mrb[0].mxu0
        %v596 = vadd.f32 0.0, %v595
        %v597 = vpop.f32.mrb[0].mxu0
        %v598 = vadd.f32 0.0, %v597
        %599 = vmatprep.mubr.bf16.mxu0 0
        %600 = vmatmul.mubr.bf16.gmra.mrb[0].mxu0 %v343
        %v601 = vpop.f32.mrb[0].mxu0
        %v602 = vadd.f32 0.0, %v601
        %v603 = vpop.f32.mrb[0].mxu0
        %v604 = vadd.f32 0.0, %v603
        %v605 = vpop.f32.mrb[0].mxu0
        %v606 = vadd.f32 0.0, %v605
        %v607 = vpop.f32.mrb[0].mxu0
        %v608 = vadd.f32 0.0, %v607
        %609 = vdwg.mxu0
        %610 = vmatprep.subr.bf16.mxu0 %v301
        %611 = vmatpush1.bf16.msra.mxu0 %v300
        %612 = vmatprep.subr.bf16.mxu0 %v313
        %613 = vmatpush1.bf16.msra.mxu0 %v312
        %614 = vmatprep.subr.bf16.mxu0 0
        %615 = vmatpush1.bf16.msra.mxu0 0
        %616 = vmatprep.subr.bf16.mxu0 0
        %617 = vmatpush1.bf16.msra.mxu0 0
        %618 = vmatprep.subr.bf16.mxu0 0
        %619 = vmatpush1.bf16.msra.mxu0 0
        %620 = vmatprep.subr.bf16.mxu0 0
        %621 = vmatpush1.bf16.msra.mxu0 0
        %622 = vmatprep.subr.bf16.mxu0 0
        %623 = vmatpush1.bf16.msra.mxu0 0
        %624 = vmatprep.subr.bf16.mxu0 0
        %625 = vmatpush1.bf16.msra.mxu0 0
        %626 = vmatprep.subr.bf16.mxu0 0
        %627 = vmatpush1.bf16.msra.mxu0 0
        %628 = vmatprep.subr.bf16.mxu0 0
        %629 = vmatpush1.bf16.msra.mxu0 0
        %630 = vmatprep.subr.bf16.mxu0 0
        %631 = vmatpush1.bf16.msra.mxu0 0
        %632 = vmatprep.subr.bf16.mxu0 0
        %633 = vmatpush1.bf16.msra.mxu0 0
        %634 = vmatprep.subr.bf16.mxu0 0
        %635 = vmatpush1.bf16.msra.mxu0 0
        %636 = vmatprep.subr.bf16.mxu0 0
        %637 = vmatpush1.bf16.msra.mxu0 0
        %638 = vmatprep.subr.bf16.mxu0 0
        %639 = vmatpush1.bf16.msra.mxu0 0
        %640 = vmatprep.subr.bf16.mxu0 0
        %641 = vmatpush1.bf16.msra.mxu0 0
        %642 = vmatprep.mubr.bf16.mxu0 0
        %643 = vmatmul.mubr.bf16.gmra.mrb[0].mxu0 %v340
        %v644 = vpop.f32.mrb[0].mxu0
        %v645 = vadd.f32 0.0, %v644
        %v646 = vpop.f32.mrb[0].mxu0
        %v647 = vadd.f32 0.0, %v646
        %v648 = vpop.f32.mrb[0].mxu0
        %v649 = vadd.f32 0.0, %v648
        %v650 = vpop.f32.mrb[0].mxu0
        %v651 = vadd.f32 0.0, %v650
        %652 = vmatprep.mubr.bf16.mxu0 0
        %653 = vmatmul.mubr.bf16.gmra.mrb[0].mxu0 %v343
        %v654 = vpop.f32.mrb[0].mxu0
        %v655 = vadd.f32 0.0, %v654
        %v656 = vpop.f32.mrb[0].mxu0
        %v657 = vadd.f32 0.0, %v656
        %v658 = vpop.f32.mrb[0].mxu0
        %v659 = vadd.f32 0.0, %v658
        %v660 = vpop.f32.mrb[0].mxu0
        %v661 = vadd.f32 0.0, %v660
        %662 = vdwg.mxu0
        %v663 = vmax.f32 %v380, 0.0
        %v664 = vmax.f32 %v382, 0.0
        %v665 = vmax.f32 %v433, 0.0
        %v666 = vmax.f32 %v435, 0.0
        %v667 = vmax.f32 %v486, 0.0
        %v668 = vmax.f32 %v488, 0.0
        %v669 = vmax.f32 %v539, 0.0
        %v670 = vmax.f32 %v541, 0.0
        %v671 = vmax.f32 %v592, 0.0
        %v672 = vmax.f32 %v594, 0.0
        %v673 = vmax.f32 %v645, 0.0
        %v674 = vmax.f32 %v647, 0.0
        %v675 = vmax.f32 %v384, 0.0
        %v676 = vmax.f32 %v386, 0.0
        %v677 = vmax.f32 %v437, 0.0
        %v678 = vmax.f32 %v439, 0.0
        %v679 = vmax.f32 %v490, 0.0
        %v680 = vmax.f32 %v492, 0.0
        %v681 = vmax.f32 %v543, 0.0
        %v682 = vmax.f32 %v545, 0.0
        %v683 = vmax.f32 %v596, 0.0
        %v684 = vmax.f32 %v598, 0.0
        %v685 = vmax.f32 %v649, 0.0
        %v686 = vmax.f32 %v651, 0.0
        %v687 = vmax.f32 %v390, 0.0
        %v688 = vmax.f32 %v392, 0.0
        %v689 = vmax.f32 %v443, 0.0
        %v690 = vmax.f32 %v445, 0.0
        %v691 = vmax.f32 %v496, 0.0
        %v692 = vmax.f32 %v498, 0.0
        %v693 = vmax.f32 %v549, 0.0
        %v694 = vmax.f32 %v551, 0.0
        %v695 = vmax.f32 %v602, 0.0
        %v696 = vmax.f32 %v604, 0.0
        %v697 = vmax.f32 %v655, 0.0
        %v698 = vmax.f32 %v657, 0.0
        %v699 = vmax.f32 %v394, 0.0
        %v700 = vmax.f32 %v396, 0.0
        %v701 = vmax.f32 %v447, 0.0
        %v702 = vmax.f32 %v449, 0.0
        %v703 = vmax.f32 %v500, 0.0
        %v704 = vmax.f32 %v502, 0.0
        %v705 = vmax.f32 %v553, 0.0
        %v706 = vmax.f32 %v555, 0.0
        %v707 = vmax.f32 %v606, 0.0
        %v708 = vmax.f32 %v608, 0.0
        %v709 = vmax.f32 %v659, 0.0
        %v710 = vmax.f32 %v661, 0.0
        %v711 = vpack.c.bf16 %v675, %v663
        %v712 = vpack.c.bf16 %v676, %v664
        %v713 = vpack.c.bf16 %v677, %v665
        %v714 = vpack.c.bf16 %v678, %v666
        %v715 = vpack.c.bf16 %v679, %v667
        %v716 = vpack.c.bf16 %v680, %v668
        %v717 = vpack.c.bf16 %v681, %v669
        %v718 = vpack.c.bf16 %v682, %v670
        %v719 = vpack.c.bf16 %v683, %v671
        %v720 = vpack.c.bf16 %v684, %v672
        %v721 = vpack.c.bf16 %v685, %v673
        %v722 = vpack.c.bf16 %v686, %v674
        %v723 = vpack.c.bf16 %v699, %v687
        %v724 = vpack.c.bf16 %v700, %v688
        %v725 = vpack.c.bf16 %v701, %v689
        %v726 = vpack.c.bf16 %v702, %v690
        %v727 = vpack.c.bf16 %v703, %v691
        %v728 = vpack.c.bf16 %v704, %v692
        %v729 = vpack.c.bf16 %v705, %v693
        %v730 = vpack.c.bf16 %v706, %v694
        %v731 = vpack.c.bf16 %v707, %v695
        %v732 = vpack.c.bf16 %v708, %v696
        %v733 = vpack.c.bf16 %v709, %v697
        %v734 = vpack.c.bf16 %v710, %v698
        %v759 = vunpack.c.l.b16 %v711
        %v760 = vunpack.c.l.b16 %v712
        %v761 = vunpack.c.l.b16 %v713
        %v762 = vunpack.c.l.b16 %v714
        %v763 = vunpack.c.l.b16 %v715
        %v764 = vunpack.c.l.b16 %v716
        %v765 = vunpack.c.l.b16 %v717
        %v766 = vunpack.c.l.b16 %v718
        %v767 = vunpack.c.l.b16 %v719
        %v768 = vunpack.c.l.b16 %v720
        %v769 = vunpack.c.l.b16 %v721
        %v770 = vunpack.c.l.b16 %v722
        %v771 = vunpack.c.h.b16 %v711
        %v772 = vunpack.c.h.b16 %v712
        %v773 = vunpack.c.h.b16 %v713
        %v774 = vunpack.c.h.b16 %v714
        %v775 = vunpack.c.h.b16 %v715
        %v776 = vunpack.c.h.b16 %v716
        %v777 = vunpack.c.h.b16 %v717
        %v778 = vunpack.c.h.b16 %v718
        %v779 = vunpack.c.h.b16 %v719
        %v780 = vunpack.c.h.b16 %v720
        %v781 = vunpack.c.h.b16 %v721
        %v782 = vunpack.c.h.b16 %v722
        %v783 = vunpack.c.l.b16 %v723
        %v784 = vunpack.c.l.b16 %v724
        %v785 = vunpack.c.l.b16 %v725
        %v786 = vunpack.c.l.b16 %v726
        %v787 = vunpack.c.l.b16 %v727
        %v788 = vunpack.c.l.b16 %v728
        %v789 = vunpack.c.l.b16 %v729
        %v790 = vunpack.c.l.b16 %v730
        %v791 = vunpack.c.l.b16 %v731
        %v792 = vunpack.c.l.b16 %v732
        %v793 = vunpack.c.l.b16 %v733
        %v794 = vunpack.c.l.b16 %v734
        %v795 = vunpack.c.h.b16 %v723
        %v796 = vunpack.c.h.b16 %v724
        %v797 = vunpack.c.h.b16 %v725
        %v798 = vunpack.c.h.b16 %v726
        %v799 = vunpack.c.h.b16 %v727
        %v800 = vunpack.c.h.b16 %v728
        %v801 = vunpack.c.h.b16 %v729
        %v802 = vunpack.c.h.b16 %v730
        %v803 = vunpack.c.h.b16 %v731
        %v804 = vunpack.c.h.b16 %v732
        %v805 = vunpack.c.h.b16 %v733
        %v806 = vunpack.c.h.b16 %v734
        %v807 = vpack.c.b16 %v760, %v759
        %v808 = vpack.c.b16 %v762, %v761
        %v809 = vpack.c.b16 %v764, %v763
        %v810 = vpack.c.b16 %v766, %v765
        %v811 = vpack.c.b16 %v768, %v767
        %v812 = vpack.c.b16 %v770, %v769
        %v813 = vpack.c.b16 %v772, %v771
        %v814 = vpack.c.b16 %v774, %v773
        %v815 = vpack.c.b16 %v776, %v775
        %v816 = vpack.c.b16 %v778, %v777
        %v817 = vpack.c.b16 %v780, %v779
        %v818 = vpack.c.b16 %v782, %v781
        %v819 = vpack.c.b16 %v784, %v783
        %v820 = vpack.c.b16 %v786, %v785
        %v821 = vpack.c.b16 %v788, %v787
        %v822 = vpack.c.b16 %v790, %v789
        %v823 = vpack.c.b16 %v792, %v791
        %v824 = vpack.c.b16 %v794, %v793
        %v825 = vpack.c.b16 %v796, %v795
        %v826 = vpack.c.b16 %v798, %v797
        %v827 = vpack.c.b16 %v800, %v799
        %v828 = vpack.c.b16 %v802, %v801
        %v829 = vpack.c.b16 %v804, %v803
        %v830 = vpack.c.b16 %v806, %v805
        %855 = vst [vmem:[%s176] sm:$0xff] %v807
        %856 = vst [vmem:[%s176 + $0x8] sm:$0xff] %v808
        %857 = vst [vmem:[%s176 + $0x10] sm:$0xff] %v809
        %858 = vst [vmem:[%s176 + $0x18] sm:$0xff] %v810
        %859 = vst [vmem:[%s176 + $0x20] sm:$0xff] %v811
        %860 = vst [vmem:[%s176 + $0x28] sm:$0xff] %v812
        %861 = vst [vmem:[%s176 + $0x30] sm:$0xff] %v813
        %862 = vst [vmem:[%s176 + $0x38] sm:$0xff] %v814
        %863 = vst [vmem:[%s176 + $0x40] sm:$0xff] %v815
        %864 = vst [vmem:[%s176 + $0x48] sm:$0xff] %v816
        %865 = vst [vmem:[%s176 + $0x50] sm:$0xff] %v817
        %866 = vst [vmem:[%s176 + $0x58] sm:$0xff] %v818
        %867 = vst [vmem:[%s176 + $0x60] sm:$0xff] %v819
        %868 = vst [vmem:[%s176 + $0x68] sm:$0xff] %v820
        %869 = vst [vmem:[%s176 + $0x70] sm:$0xff] %v821
        %870 = vst [vmem:[%s176 + $0x78] sm:$0xff] %v822
        %871 = vst [vmem:[%s176 + $0x80] sm:$0xff] %v823
        %872 = vst [vmem:[%s176 + $0x88] sm:$0xff] %v824
        %873 = vst [vmem:[%s176 + $0x90] sm:$0xff] %v825
        %874 = vst [vmem:[%s176 + $0x98] sm:$0xff] %v826
        %875 = vst [vmem:[%s176 + $0xa0] sm:$0xff] %v827
        %876 = vst [vmem:[%s176 + $0xa8] sm:$0xff] %v828
        %877 = vst [vmem:[%s176 + $0xb0] sm:$0xff] %v829
        %878 = vst [vmem:[%s176 + $0xb8] sm:$0xff] %v830
        %s879 = sand.u32 %s75, 1
        %s880 = scalar_lea.sflag [#allocation4], %s879
        %s881 = sand.u32 %s75, 1
        %s882 = smul.addr %s881, 192
        %s883 = scalar_lea.vmem [#allocation7], %s882
        // Predicated region
        $region37: #{tpu_custom_call.1} parent=27 // pred_check
          %p884 = pneg %p85
        $region38: #{tpu_custom_call.1} parent=27 // pred_check_branch
          %886 = sbr.rel (%p884) target = $region40
        $region39: #{tpu_custom_call.1} parent=27 // pred_region
          %s887 = smul.u32 12, %s20
          %s889 = ssub.s32 3072, 3072
          %890 = vsyncadd %s880, %s889
          %s891 = smul.addr %s887, 64
          %s892 = scalar_lea.hbm %s2, %s891
          %s893 = sshll.u32 %s883, 4
          %s894 = int_to_ptr.vmem [resolvable:$true] %s893
          %899 = dma.vmem_to_hbm [thread:$0]  %s894, 3072, %s892, %s880, 768, 1536, 48
        $region40: #{tpu_custom_call.1} parent=27 // pred_fallthru
          _
      $region28: #{tpu_custom_call.1} parent=5 // pred_fallthru
        _
      %p900 = scmp.le.s32.totalorder 2, %s15
      // Predicated region
      $region41: #{tpu_custom_call.1} parent=5 // pred_check
        %p901 = pneg %p900
      $region42: #{tpu_custom_call.1} parent=5 // pred_check_branch
        %903 = sbr.rel (%p901) target = $region44
      $region43: #{tpu_custom_call.1} parent=5 // pred_region
        %s904 = ssub.s32 %s15, 2
        // Predicated region
        $region45: #{tpu_custom_call.1} parent=43 // pred_check
          %p905 = pneg %p91
        $region46: #{tpu_custom_call.1} parent=43 // pred_check_branch
          %907 = sbr.rel (%p905) target = $region48
        $region47: #{tpu_custom_call.1} parent=43 // pred_region
          %s908 = sand.u32 %s76, 1
          %s909 = scalar_lea.sflag [#allocation4], %s908
          %s910 = sand.u32 %s76, 1
          %s911 = smul.addr %s910, 192
          %s912 = scalar_lea.vmem [#allocation7], %s911
          %913 = dma.done %s909, 3072
        $region48: #{tpu_custom_call.1} parent=43 // pred_fallthru
          _
      $region44: #{tpu_custom_call.1} parent=5 // pred_fallthru
        _
    $region6: #{tpu_custom_call.1} parent=1 // loop_footer
      %s19 = sadd.s32 1, %s15
    $region7: #{tpu_custom_call.1} parent=1 // loop_footer_branch
      %14 = sbr.rel target = $region3
    $region8: #{tpu_custom_call.1} parent=1 // loop_exit
      _
    %914 = vsyncpa [#allocation3], 1
    %s915 = scalar_lea.sflag [#allocation3], 1
    %916 = vsyncpa %s915, 1
    %917 = vsyncpa [#allocation6], 1
    %918 = vsyncpa [#allocation4], 1
    %s919 = scalar_lea.sflag [#allocation4], 1
    %920 = vsyncpa %s919, 1

</llo_original>
